<compile_context>
chip_gen: v7x
topology: tpu7x:2x2x1
jax: 0.10.0
libtpu: 0.0.40
codegen_flags: <defaults>
</compile_context>

<pallas_src>
import functools

import numpy as np
import jax
import jax.numpy as jnp
from jax.experimental import pallas as pl
from jax.experimental.pallas import tpu as pltpu


# ----------------------------------------------------------------------------
# Pallas kernel
# ----------------------------------------------------------------------------
def _channel_attention_kernel(x_ref, w1_ref, w2t_ref, att_ref, sum_sc, max_sc,
                              *, inv_s):
    # x_ref   : (C, tS)   NCHW tile — channels on sublanes, H*W on the lane axis
    # w1_ref  : (C, Cr)   fc1 weight (so that h = v @ w1)
    # w2t_ref : (C, Cr)   fc2 weight, transposed
    # att_ref : (C, 1)    per-image attention block (resident across the t axis)
    # sum_sc  : (C, LW)   lane-partial running sum  (f32)
    # max_sc  : (C, LW)   lane-partial running max  (f32)
    t = pl.program_id(1)

    @pl.when(t == 0)
    def _init():
        sum_sc[...] = jnp.zeros_like(sum_sc)
        max_sc[...] = jnp.full_like(max_sc, -jnp.inf)

    ts = x_ref.shape[-1]
    lw = sum_sc.shape[-1]
    # Streaming loop: pure lane-wise vadd / vmax against the resident lane-partial
    # accumulators — no per-tile cross-lane reduction.  Chunked so each op touches
    # at most ~512 KiB and register pressure stays low.
    for j in range(ts // lw):
        chunk = x_ref[:, j * lw:(j + 1) * lw].astype(jnp.float32)       # (C, lw)
        sum_sc[...] += chunk
        max_sc[...] = jnp.maximum(max_sc[...], chunk)

    @pl.when(t == pl.num_programs(1) - 1)
    def _finalize():
        # One amortized cross-lane (XLU) reduce per channel for the whole stream.
        avg = jnp.sum(sum_sc[...], axis=1, keepdims=True) * inv_s        # (C, 1)
        mx = jnp.max(max_sc[...], axis=1, keepdims=True)                 # (C, 1)

        # Shared MLP  z = relu(v @ w1) @ w2, evaluated channel-on-sublane with
        # broadcast-multiply + tiny reduces (Cr = C/16).  FLOPs are negligible;
        # keeping it off the MXU avoids a matmul drain/epilogue per image.
        def mlp(v):                                                      # v: (C, 1)
            h = jnp.maximum(
                jnp.sum(w1_ref[...] * v, axis=0, keepdims=True), 0.0)    # (1, Cr)
            return jnp.sum(w2t_ref[...] * h, axis=1, keepdims=True)      # (C, 1)

        z = mlp(avg) + mlp(mx)                                           # (C, 1)
        # Exact sigmoid (runs once per image — cost negligible).
        att_ref[...] = (1.0 / (1.0 + jnp.exp(-z))).astype(att_ref.dtype)


# ----------------------------------------------------------------------------
# Tiling helpers
# ----------------------------------------------------------------------------
def _pick_s_tile(s, c, itemsize, target_bytes):
    """Largest spatial tile (multiple of 128 that divides S) near target_bytes."""
    if s % 128 != 0:
        # Last block dim must be a multiple of 128 or the full extent; for
        # irregular spatial sizes (e.g. 7x7) stream the whole map as one block.
        return s
    blocks = s // 128
    max_blocks = max(1, target_bytes // (128 * c * itemsize))
    best = 1
    for d in range(1, blocks + 1):
        if blocks % d == 0 and d <= max_blocks:
            best = d
    return best * 128


def _pick_lane_width(ts, c, acc_bytes=512 << 10):
    """Lane width of the partial sum/max accumulators (multiple of 128 dividing ts)."""
    if ts % 128 != 0:
        return ts
    lw = 128
    while lw * 2 <= ts and ts % (lw * 2) == 0 and c * (lw * 2) * 4 <= acc_bytes:
        lw *= 2
    return lw


# ----------------------------------------------------------------------------
# Wrapper
# ----------------------------------------------------------------------------
def channel_attention(x_nchw, w1, w2, *, target_tile_bytes=4 << 20):
    """PyTorch ChannelAttention.forward.  x: (N, C, H, W) -> (N, C, 1, 1).

    w1: (C, Cr) == fc1.weight[:, :, 0, 0].T     (h = v @ w1)
    w2: (Cr, C) == fc2.weight[:, :, 0, 0].T     (z = h @ w2)
    """
    N, C, H, W = x_nchw.shape
    Cr = w1.shape[1]
    S = H * W
    itemsize = jnp.dtype(x_nchw.dtype).itemsize

    # NCHW consumed directly — (N, C, H, W) -> (N, C, S) is a free view; no HBM transpose.
    x = x_nchw.reshape(N, C, S)
    w2t = jnp.transpose(w2)                      # (C, Cr); tiny, done once

    # Byte-sized spatial tiles: double-buffered x tile (2 * ts * C * itemsize) +
    # double-buffered weights + 2 lane-partial accumulators stay well inside the
    # explicit 32 MiB scoped-VMEM budget below on every generation.
    ts = _pick_s_tile(S, C, itemsize, target_tile_bytes)
    assert S % ts == 0, (S, ts)
    lw = _pick_lane_width(ts, C)
    assert ts % lw == 0, (ts, lw)

    cost = pl.CostEstimate(
        flops=int(N * (2 * S * C + 8 * C * Cr + 4 * C)),
        transcendentals=int(N * C),                                   # exp in sigmoid
        bytes_accessed=int(x.size * itemsize + (w1.size + w2.size) * 4
                           + N * C * itemsize),
    )

    att = pl.pallas_call(
        functools.partial(_channel_attention_kernel, inv_s=1.0 / S),
        out_shape=jax.ShapeDtypeStruct((N, C, 1), x_nchw.dtype),
        grid=(N, S // ts),
        in_specs=[
            pl.BlockSpec((None, C, ts), lambda b, t: (b, 0, t)),
            pl.BlockSpec((C, Cr), lambda b, t: (0, 0)),
            pl.BlockSpec((C, Cr), lambda b, t: (0, 0)),
        ],
        out_specs=pl.BlockSpec((None, C, 1), lambda b, t: (b, 0, 0)),
        scratch_shapes=[
            pltpu.VMEM((C, lw), jnp.float32),    # lane-partial running sum (avg pool)
            pltpu.VMEM((C, lw), jnp.float32),    # lane-partial running max
        ],
        compiler_params=pltpu.CompilerParams(
            dimension_semantics=("parallel", "arbitrary"),
            vmem_limit_bytes=32 * 1024 * 1024,
        ),
        cost_estimate=cost,
    )(x, w1, w2t)

    # (N, C, 1) -> (N, C, 1, 1): free reshape, no transpose.
    return att.reshape(N, C, 1, 1)


# ----------------------------------------------------------------------------
# Pure-JAX reference (silent correctness check)
# ----------------------------------------------------------------------------
def reference_forward(x_nchw, w1, w2):
    avg = jnp.mean(x_nchw, axis=(2, 3))     # (N, C)
    mx = jnp.max(x_nchw, axis=(2, 3))       # (N, C)

    def mlp(v):
        return jax.nn.relu(v @ w1) @ w2

    return jax.nn.sigmoid(mlp(avg) + mlp(mx))[:, :, None, None]


# ----------------------------------------------------------------------------
if __name__ == "__main__":
    key = jax.random.PRNGKey(0)
    kx, k1, k2 = jax.random.split(key, 3)

    # in_planes=32 -> reduced dim = in_planes // 16 = 2 ; S = 16*16 = 256
    N, C, H, W = 2, 32, 16, 16
    Cr = C // 16

    x = jax.random.normal(kx, (N, C, H, W), jnp.float32)
    w1 = jax.random.normal(k1, (C, Cr), jnp.float32) * (2.0 / C) ** 0.5    # fc1 (1x1 conv, no bias)
    w2 = jax.random.normal(k2, (Cr, C), jnp.float32) * (2.0 / Cr) ** 0.5   # fc2 (1x1 conv, no bias)

    out = jax.block_until_ready(channel_attention(x, w1, w2))
    assert out.shape == (N, C, 1, 1)

    ref = reference_forward(x, w1, w2)
    np.testing.assert_allclose(np.asarray(out), np.asarray(ref), rtol=1e-5, atol=1e-5)
    print("KERNEL_OK")
</pallas_src>

<mosaic_0001>
module attributes {stable_mosaic.version = 11 : i64} {
  func.func @_channel_attention_kernel(%arg0: i32, %arg1: i32, %arg2: memref<1x32x256xf32, #tpu.memory_space<vmem>>, %arg3: memref<32x2xf32, #tpu.memory_space<vmem>>, %arg4: memref<32x2xf32, #tpu.memory_space<vmem>>, %arg5: memref<1x32x1xf32, #tpu.memory_space<vmem>>, %arg6: memref<32x256xf32, #tpu.memory_space<vmem>>, %arg7: memref<32x256xf32, #tpu.memory_space<vmem>>) attributes {dimension_semantics = [#tpu.dimension_semantics<parallel>, #tpu.dimension_semantics<arbitrary>], iteration_bounds = array<i64: 2, 1>, scalar_prefetch = 0 : i64, scratch_operands = 2 : i64, tpu.core_type = #tpu.core_type<tc>, window_params = [{transform_indices = @transform_0, window_bounds = array<i64: 1, 32, 256>}, {pipeline_mode = #tpu.pipeline_mode<synchronous>, transform_indices = @transform_1, window_bounds = array<i64: 32, 2>}, {pipeline_mode = #tpu.pipeline_mode<synchronous>, transform_indices = @transform_2, window_bounds = array<i64: 32, 2>}, {transform_indices = @transform_3, window_bounds = array<i64: 1, 32, 1>}]} {
    %c0_i32 = arith.constant 0 : i32
    %0 = arith.cmpi eq, %arg1, %c0_i32 : i32
    %1 = arith.extui %0 : i1 to i32
    %c0_i32_0 = arith.constant 0 : i32
    %2 = arith.cmpi ne, %1, %c0_i32_0 : i32
    scf.if %2 {
      %cst = arith.constant 0.000000e+00 : f32
      %14 = vector.broadcast %cst : f32 to vector<32x256xf32>
      %c0_13 = arith.constant 0 : index
      %c0_14 = arith.constant 0 : index
      %15 = vector.load %arg6[%c0_13, %c0_14] : memref<32x256xf32, #tpu.memory_space<vmem>>, vector<32x256xf32>
      tpu.vector_store %arg6[%c0_13, %c0_14], %14 {strides = array<i32>} : memref<32x256xf32, #tpu.memory_space<vmem>>, vector<32x256xf32>,
      %cst_15 = arith.constant 0xFF800000 : f32
      %16 = vector.broadcast %cst_15 : f32 to vector<32x256xf32>
      %c0_16 = arith.constant 0 : index
      %c0_17 = arith.constant 0 : index
      %17 = vector.load %arg7[%c0_16, %c0_17] : memref<32x256xf32, #tpu.memory_space<vmem>>, vector<32x256xf32>
      tpu.vector_store %arg7[%c0_16, %c0_17], %16 {strides = array<i32>} : memref<32x256xf32, #tpu.memory_space<vmem>>, vector<32x256xf32>,
    } else {
    }
    %c0 = arith.constant 0 : index
    %c0_1 = arith.constant 0 : index
    %c0_2 = arith.constant 0 : index
    %3 = vector.load %arg2[%c0, %c0_1, %c0_2] : memref<1x32x256xf32, #tpu.memory_space<vmem>>, vector<1x32x256xf32>
    %4 = vector.shape_cast %3 : vector<1x32x256xf32> to vector<32x256xf32>
    %c0_3 = arith.constant 0 : index
    %c0_4 = arith.constant 0 : index
    %5 = vector.load %arg6[%c0_3, %c0_4] : memref<32x256xf32, #tpu.memory_space<vmem>>, vector<32x256xf32>
    %6 = arith.addf %5, %4 : vector<32x256xf32>
    %c0_5 = arith.constant 0 : index
    %c0_6 = arith.constant 0 : index
    %7 = vector.load %arg6[%c0_5, %c0_6] : memref<32x256xf32, #tpu.memory_space<vmem>>, vector<32x256xf32>
    tpu.vector_store %arg6[%c0_5, %c0_6], %6 {strides = array<i32>} : memref<32x256xf32, #tpu.memory_space<vmem>>, vector<32x256xf32>,
    %c0_7 = arith.constant 0 : index
    %c0_8 = arith.constant 0 : index
    %8 = vector.load %arg7[%c0_7, %c0_8] : memref<32x256xf32, #tpu.memory_space<vmem>>, vector<32x256xf32>
    %9 = arith.maximumf %8, %4 : vector<32x256xf32>
    %c0_9 = arith.constant 0 : index
    %c0_10 = arith.constant 0 : index
    %10 = vector.load %arg7[%c0_9, %c0_10] : memref<32x256xf32, #tpu.memory_space<vmem>>, vector<32x256xf32>
    tpu.vector_store %arg7[%c0_9, %c0_10], %9 {strides = array<i32>} : memref<32x256xf32, #tpu.memory_space<vmem>>, vector<32x256xf32>,
    %c0_i32_11 = arith.constant 0 : i32
    %11 = arith.cmpi eq, %arg1, %c0_i32_11 : i32
    %12 = arith.extui %11 : i1 to i32
    %c0_i32_12 = arith.constant 0 : i32
    %13 = arith.cmpi ne, %12, %c0_i32_12 : i32
    scf.if %13 {
      %c0_13 = arith.constant 0 : index
      %c0_14 = arith.constant 0 : index
      %14 = vector.load %arg6[%c0_13, %c0_14] : memref<32x256xf32, #tpu.memory_space<vmem>>, vector<32x256xf32>
      %cst = arith.constant dense<0.000000e+00> : vector<32xf32>
      %15 = vector.multi_reduction <add>, %14, %cst [1] : vector<32x256xf32> to vector<32xf32>
      %16 = vector.shape_cast %15 : vector<32xf32> to vector<32x1xf32>
      %cst_15 = arith.constant 3.906250e-03 : f32
      %17 = vector.broadcast %cst_15 : f32 to vector<32x1xf32>
      %18 = arith.mulf %16, %17 : vector<32x1xf32>
      %c0_16 = arith.constant 0 : index
      %c0_17 = arith.constant 0 : index
      %19 = vector.load %arg7[%c0_16, %c0_17] : memref<32x256xf32, #tpu.memory_space<vmem>>, vector<32x256xf32>
      %cst_18 = arith.constant dense<0xFF800000> : vector<32xf32>
      %20 = vector.multi_reduction <maximumf>, %19, %cst_18 [1] : vector<32x256xf32> to vector<32xf32>
      %21 = vector.shape_cast %20 : vector<32xf32> to vector<32x1xf32>
      %c0_19 = arith.constant 0 : index
      %c0_20 = arith.constant 0 : index
      %22 = vector.load %arg3[%c0_19, %c0_20] : memref<32x2xf32, #tpu.memory_space<vmem>>, vector<32x2xf32>
      %23 = vector.broadcast %18 : vector<32x1xf32> to vector<32x2xf32>
      %24 = arith.mulf %22, %23 : vector<32x2xf32>
      %cst_21 = arith.constant dense<0.000000e+00> : vector<2xf32>
      %25 = vector.multi_reduction <add>, %24, %cst_21 [0] : vector<32x2xf32> to vector<2xf32>
      %26 = vector.shape_cast %25 : vector<2xf32> to vector<1x2xf32>
      %cst_22 = arith.constant 0.000000e+00 : f32
      %27 = vector.broadcast %cst_22 : f32 to vector<1x2xf32>
      %28 = arith.maximumf %26, %27 : vector<1x2xf32>
      %c0_23 = arith.constant 0 : index
      %c0_24 = arith.constant 0 : index
      %29 = vector.load %arg4[%c0_23, %c0_24] : memref<32x2xf32, #tpu.memory_space<vmem>>, vector<32x2xf32>
      %30 = vector.broadcast %28 : vector<1x2xf32> to vector<32x2xf32>
      %31 = arith.mulf %29, %30 : vector<32x2xf32>
      %cst_25 = arith.constant dense<0.000000e+00> : vector<32xf32>
      %32 = vector.multi_reduction <add>, %31, %cst_25 [1] : vector<32x2xf32> to vector<32xf32>
      %33 = vector.shape_cast %32 : vector<32xf32> to vector<32x1xf32>
      %c0_26 = arith.constant 0 : index
      %c0_27 = arith.constant 0 : index
      %34 = vector.load %arg3[%c0_26, %c0_27] : memref<32x2xf32, #tpu.memory_space<vmem>>, vector<32x2xf32>
      %35 = vector.broadcast %21 : vector<32x1xf32> to vector<32x2xf32>
      %36 = arith.mulf %34, %35 : vector<32x2xf32>
      %cst_28 = arith.constant dense<0.000000e+00> : vector<2xf32>
      %37 = vector.multi_reduction <add>, %36, %cst_28 [0] : vector<32x2xf32> to vector<2xf32>
      %38 = vector.shape_cast %37 : vector<2xf32> to vector<1x2xf32>
      %cst_29 = arith.constant 0.000000e+00 : f32
      %39 = vector.broadcast %cst_29 : f32 to vector<1x2xf32>
      %40 = arith.maximumf %38, %39 : vector<1x2xf32>
      %c0_30 = arith.constant 0 : index
      %c0_31 = arith.constant 0 : index
      %41 = vector.load %arg4[%c0_30, %c0_31] : memref<32x2xf32, #tpu.memory_space<vmem>>, vector<32x2xf32>
      %42 = vector.broadcast %40 : vector<1x2xf32> to vector<32x2xf32>
      %43 = arith.mulf %41, %42 : vector<32x2xf32>
      %cst_32 = arith.constant dense<0.000000e+00> : vector<32xf32>
      %44 = vector.multi_reduction <add>, %43, %cst_32 [1] : vector<32x2xf32> to vector<32xf32>
      %45 = vector.shape_cast %44 : vector<32xf32> to vector<32x1xf32>
      %46 = arith.addf %33, %45 : vector<32x1xf32>
      %cst_33 = arith.constant 0.000000e+00 : f32
      %47 = vector.broadcast %cst_33 : f32 to vector<32x1xf32>
      %48 = arith.subf %47, %46 : vector<32x1xf32>
      %49 = math.exp %48 : vector<32x1xf32>
      %cst_34 = arith.constant 1.000000e+00 : f32
      %50 = vector.broadcast %cst_34 : f32 to vector<32x1xf32>
      %51 = arith.addf %50, %49 : vector<32x1xf32>
      %cst_35 = arith.constant 1.000000e+00 : f32
      %52 = vector.broadcast %cst_35 : f32 to vector<32x1xf32>
      %53 = arith.divf %52, %51 : vector<32x1xf32>
      %c0_36 = arith.constant 0 : index
      %c0_37 = arith.constant 0 : index
      %c0_38 = arith.constant 0 : index
      %54 = vector.load %arg5[%c0_36, %c0_37, %c0_38] : memref<1x32x1xf32, #tpu.memory_space<vmem>>, vector<1x32x1xf32>
      %55 = vector.shape_cast %54 : vector<1x32x1xf32> to vector<32x1xf32>
      %56 = vector.shape_cast %53 : vector<32x1xf32> to vector<1x32x1xf32>
      tpu.vector_store %arg5[%c0_36, %c0_37, %c0_38], %56 {strides = array<i32>} : memref<1x32x1xf32, #tpu.memory_space<vmem>>, vector<1x32x1xf32>,
    } else {
    }
    return
  }
  func.func @transform_0(%arg0: i32, %arg1: i32) -> (i32, i32, i32) {
    %c0_i32 = arith.constant 0 : i32
    %c0_i32_0 = arith.constant 0 : i32
    return %arg0, %c0_i32, %arg1 : i32, i32, i32
  }
  func.func @transform_1(%arg0: i32, %arg1: i32) -> (i32, i32) {
    %c0_i32 = arith.constant 0 : i32
    %c0_i32_0 = arith.constant 0 : i32
    %c0_i32_1 = arith.constant 0 : i32
    return %c0_i32, %c0_i32_0 : i32, i32
  }
  func.func @transform_2(%arg0: i32, %arg1: i32) -> (i32, i32) {
    %c0_i32 = arith.constant 0 : i32
    %c0_i32_0 = arith.constant 0 : i32
    %c0_i32_1 = arith.constant 0 : i32
    return %c0_i32, %c0_i32_0 : i32, i32
  }
  func.func @transform_3(%arg0: i32, %arg1: i32) -> (i32, i32, i32) {
    %c0_i32 = arith.constant 0 : i32
    %c0_i32_0 = arith.constant 0 : i32
    %c0_i32_1 = arith.constant 0 : i32
    return %arg0, %c0_i32, %c0_i32_0 : i32, i32, i32
  }
}

</mosaic_0001>

<llo_original>
// kernel: tpu_custom_call.1
$region0: #{tpu_custom_call.1}
  #allocation0 [shape = 'u32[]', space=smem, size = 0x4, offset = 0x4, fixed_abs, tag = 'smem constant byte address 0x4 - core index']
  #allocation1 [shape = 'u32[144,128]{1,0:T(1,128)}', space=vmem, size = 0x12000, scoped, tag = 'internal scratch']
  #allocation2 [shape = 'f32[32,256]{1,0:T(8,128)}', space=vmem, size = 0x8000, scoped, tag = 'scratch operand']
  #allocation3 [shape = 'f32[32,256]{1,0:T(8,128)}', space=vmem, size = 0x8000, scoped, tag = 'scratch operand']
  %s0 = inlined_call_operand.hbm [shape: f32[2,32,256], index: 0, kind: input, shape index: {}]
  %s1 = inlined_call_operand.vmem [shape: f32[32,2], index: 1, kind: input, shape index: {}]
  %s2 = inlined_call_operand.vmem [shape: f32[32,2], index: 2, kind: input, shape index: {}]
  %s3 = inlined_call_operand.vmem [shape: f32[2,32,1], index: 3, kind: output, shape index: {}]
  %s4 = sld [smem:[#allocation0]]
  $region57: #{tpu_custom_call.1} parent=0
    _
  %s6 = ssub.s32 1, %s4
  %s7 = scalar_select 0, %s6, %s4
  $region1: #{tpu_custom_call.1} parent=0
    #allocation4 [shape = 'u8[65536]{0}', space=vmem, size = 0x10000, scoped, tag = 'input window, operand 0']
    #allocation5 [shape = 's32[2]{0}', space=sflag, size = 0x8, scoped, tag = 'scoped memory for tpu_custom_call.1']
    %8 = vsyncpa [#allocation5], 0
    %s9 = scalar_lea.sflag [#allocation5], 1
    %10 = vsyncpa %s9, 0
    loop: start=0, step=1, limit=4
    $region2: #{tpu_custom_call.1} parent=1 // loop_pre_header
      _
    $region3: #{tpu_custom_call.1} parent=1 // loop_header
      %s12 = sphi 0, %s16
      %p13 = scmp.ge.s32.totalorder %s12, 4
      %s19 = sphi 0, %s31
      %s20 = sphi 0, %s27
      %s21 = sphi 0, %s19
      %s22 = sphi 0, %s20
      %s23 = sphi 0, %s21
      %s24 = sphi 0, %s22
      %s36 = sphi 0, %s38
      %s39 = sphi 0, %s36
      %s40 = sphi 0, %s39
      %s56 = sphi 0, %s40
      %s60 = sphi 0, %s60
      %s62 = sphi 0, %s60
      %s63 = sphi 0, %s62
      %s77 = sphi 0, %s63
      %s81 = sphi 0, %s81
      %s83 = sphi 0, %s81
      %s84 = sphi 0, %s83
      %s98 = sphi 0, %s84
      %s104 = sphi 0, %s106
      %s107 = sphi 0, %s104
      %s108 = sphi 0, %s107
      %s124 = sphi 0, %s108
    $region4: #{tpu_custom_call.1} parent=1 // loop_header_branch
      %15 = sbr.rel (%p13) target = $region8
    $region5: #{tpu_custom_call.1} parent=1 // loop_body
      %s17 = ssub.s32 %s12, 1
      %s18 = ssub.s32 %s12, 2
      %s25 = sadd.s32 1, %s20
      %p26 = scmp.ge.s32.totalorder %s25, 1
      %s27 = scalar_select %p26, 0, %s25
      %s28 = sadd.s32 1, %s19
      %s29 = scalar_select %p26, %s28, %s19
      %p30 = scmp.ge.s32.totalorder %s29, 2
      %s31 = scalar_select %p30, 0, %s29
      %s32 = ssub.s32 %s19, %s31
      %s33 = ssub.s32 %s20, %s27
      %s34 = sor.u32 %s32, %s33
      %p35 = scmp.eq.s32.totalorder %s34, 0
      %s37 = sadd.s32 %s36, 1
      %s38 = scalar_select %p35, %s36, %s37
      %p41 = pneg %p35
      %p42 = scmp.eq.s32.totalorder %s12, 1
      %p43 = por %p41, %p42
      %p44 = scmp.ne.s32.totalorder %s36, %s39
      %p45 = scmp.eq.s32.totalorder %s12, 0
      %p46 = por %p44, %p45
      %p47 = scmp.ne.s32.totalorder %s36, %s39
      %p48 = scmp.eq.s32.totalorder %s17, 1
      %p49 = por %p47, %p48
      %p50 = scmp.ne.s32.totalorder %s39, %s40
      %p51 = scmp.eq.s32.totalorder %s17, 0
      %p52 = por %p50, %p51
      %p53 = scmp.ne.s32.totalorder %s39, %s40
      %p54 = scmp.eq.s32.totalorder %s18, 1
      %p55 = por %p53, %p54
      %p57 = scmp.ne.s32.totalorder %s40, %s56
      %p58 = scmp.eq.s32.totalorder %s18, 0
      %p59 = por %p57, %p58
      %s61 = sadd.s32 %s60, 1
      %p64 = scmp.eq.s32.totalorder %s12, 1
      %p65 = scmp.ne.s32.totalorder %s60, %s62
      %p66 = scmp.eq.s32.totalorder %s12, 0
      %p67 = por %p65, %p66
      %p68 = scmp.ne.s32.totalorder %s60, %s62
      %p69 = scmp.eq.s32.totalorder %s17, 1
      %p70 = por %p68, %p69
      %p71 = scmp.ne.s32.totalorder %s62, %s63
      %p72 = scmp.eq.s32.totalorder %s17, 0
      %p73 = por %p71, %p72
      %p74 = scmp.ne.s32.totalorder %s62, %s63
      %p75 = scmp.eq.s32.totalorder %s18, 1
      %p76 = por %p74, %p75
      %p78 = scmp.ne.s32.totalorder %s63, %s77
      %p79 = scmp.eq.s32.totalorder %s18, 0
      %p80 = por %p78, %p79
      %s82 = sadd.s32 %s81, 1
      %p85 = scmp.eq.s32.totalorder %s12, 1
      %p86 = scmp.ne.s32.totalorder %s81, %s83
      %p87 = scmp.eq.s32.totalorder %s12, 0
      %p88 = por %p86, %p87
      %p89 = scmp.ne.s32.totalorder %s81, %s83
      %p90 = scmp.eq.s32.totalorder %s17, 1
      %p91 = por %p89, %p90
      %p92 = scmp.ne.s32.totalorder %s83, %s84
      %p93 = scmp.eq.s32.totalorder %s17, 0
      %p94 = por %p92, %p93
      %p95 = scmp.ne.s32.totalorder %s83, %s84
      %p96 = scmp.eq.s32.totalorder %s18, 1
      %p97 = por %p95, %p96
      %p99 = scmp.ne.s32.totalorder %s84, %s98
      %p100 = scmp.eq.s32.totalorder %s18, 0
      %p101 = por %p99, %p100
      %s102 = ssub.s32 %s19, %s31
      %p103 = scmp.eq.s32.totalorder %s102, 0
      %s105 = sadd.s32 %s104, 1
      %s106 = scalar_select %p103, %s104, %s105
      %p109 = pneg %p103
      %p110 = scmp.eq.s32.totalorder %s12, 1
      %p111 = por %p109, %p110
      %p112 = scmp.ne.s32.totalorder %s104, %s107
      %p113 = scmp.eq.s32.totalorder %s12, 0
      %p114 = por %p112, %p113
      %p115 = scmp.ne.s32.totalorder %s104, %s107
      %p116 = scmp.eq.s32.totalorder %s17, 1
      %p117 = por %p115, %p116
      %p118 = scmp.ne.s32.totalorder %s107, %s108
      %p119 = scmp.eq.s32.totalorder %s17, 0
      %p120 = por %p118, %p119
      %p121 = scmp.ne.s32.totalorder %s107, %s108
      %p122 = scmp.eq.s32.totalorder %s18, 1
      %p123 = por %p121, %p122
      %p125 = scmp.ne.s32.totalorder %s108, %s124
      %p126 = scmp.eq.s32.totalorder %s18, 0
      %p127 = por %p125, %p126
      %p128 = scmp.le.s32.totalorder 1, %s12
      %p129 = scmp.lt.s32.totalorder %s12, 3
      %p130 = pnand %p128, %p129
      %p131 = pneg %p130
      // Predicated region
      $region9: #{tpu_custom_call.1} parent=5 // pred_check
        _
      $region10: #{tpu_custom_call.1} parent=5 // pred_check_branch
        %133 = sbr.rel (%p130) target = $region12
      $region11: #{tpu_custom_call.1} parent=5 // pred_region
        %s134 = ssub.s32 %s12, 1
        // Predicated region
        $region13: #{tpu_custom_call.1} parent=11 // pred_check
          %p135 = pneg %p73
        $region14: #{tpu_custom_call.1} parent=11 // pred_check_branch
          %137 = sbr.rel (%p135) target = $region16
        $region15: #{tpu_custom_call.1} parent=11 // pred_region
          _
        $region16: #{tpu_custom_call.1} parent=11 // pred_fallthru
          _
        // Predicated region
        $region17: #{tpu_custom_call.1} parent=11 // pred_check
          %p138 = pneg %p94
        $region18: #{tpu_custom_call.1} parent=11 // pred_check_branch
          %140 = sbr.rel (%p138) target = $region20
        $region19: #{tpu_custom_call.1} parent=11 // pred_region
          _
        $region20: #{tpu_custom_call.1} parent=11 // pred_fallthru
          _
      $region12: #{tpu_custom_call.1} parent=5 // pred_fallthru
        _
      %p141 = scmp.lt.s32.totalorder %s12, 2
      // Predicated region
      $region21: #{tpu_custom_call.1} parent=5 // pred_check
        %p142 = pneg %p141
      $region22: #{tpu_custom_call.1} parent=5 // pred_check_branch
        %144 = sbr.rel (%p142) target = $region24
      $region23: #{tpu_custom_call.1} parent=5 // pred_region
        // Predicated region
        $region25: #{tpu_custom_call.1} parent=23 // pred_check
          %p145 = pneg %p46
        $region26: #{tpu_custom_call.1} parent=23 // pred_check_branch
          %147 = sbr.rel (%p145) target = $region28
        $region27: #{tpu_custom_call.1} parent=23 // pred_region
          %s148 = sand.u32 %s36, 1
          %s149 = scalar_lea.sflag [#allocation5], %s148
          %s150 = sand.u32 %s36, 1
          %s151 = smul.addr %s150, 64
          %s152 = scalar_lea.vmem [#allocation4], %s151
          %s153 = smul.u32 2, %s20
          %s155 = ssub.s32 1024, 1024
          %156 = vsyncadd %s149, %s155
          %s157 = smul.addr %s19, 8
          %s158 = sadd.s32 %s153, %s157
          %s159 = smul.addr %s158, 128
          %s160 = scalar_lea.hbm %s0, %s159
          %s161 = sshll.u32 %s152, 4
          %s162 = int_to_ptr.vmem [resolvable:$true] %s161
          %167 = dma.hbm_to_vmem [thread:$0]  %s160, 1024, %s162, %s149, 256, 256, 16
        $region28: #{tpu_custom_call.1} parent=23 // pred_fallthru
          _
      $region24: #{tpu_custom_call.1} parent=5 // pred_fallthru
        _
      %p168 = scmp.le.s32.totalorder 1, %s12
      %p169 = scmp.lt.s32.totalorder %s12, 3
      %p170 = pnand %p168, %p169
      %p171 = pneg %p170
      // Predicated region
      $region29: #{tpu_custom_call.1} parent=5 // pred_check
        _
      $region30: #{tpu_custom_call.1} parent=5 // pred_check_branch
        %173 = sbr.rel (%p170) target = $region32
      $region31: #{tpu_custom_call.1} parent=5 // pred_region
        %s174 = ssub.s32 %s12, 1
        %s175 = sand.u32 %s39, 1
        %s176 = scalar_lea.sflag [#allocation5], %s175
        %s177 = sand.u32 %s39, 1
        %s178 = smul.addr %s177, 64
        %s179 = scalar_lea.vmem [#allocation4], %s178
        // Predicated region
        $region33: #{tpu_custom_call.1} parent=31 // pred_check
          %p180 = pneg %p52
        $region34: #{tpu_custom_call.1} parent=31 // pred_check_branch
          %182 = sbr.rel (%p180) target = $region36
        $region35: #{tpu_custom_call.1} parent=31 // pred_region
          %183 = dma.done %s176, 1024
        $region36: #{tpu_custom_call.1} parent=31 // pred_fallthru
          _
        %s184 = sand.u32 %s39, 1
        %s185 = scalar_lea.sflag [#allocation5], %s184
        %s186 = sand.u32 %s39, 1
        %s187 = smul.addr %s186, 64
        %s188 = scalar_lea.vmem [#allocation4], %s187
        %p189 = pneg %p52
        %p190 = pneg %p49
        %p191 = pneg %p73
        %p192 = pneg %p70
        %p193 = pneg %p94
        %p194 = pneg %p91
        %p195 = pneg %p120
        %p196 = pneg %p117
        %p197 = scmp.lt.s32.totalorder %s21, 1
        %s198 = scalar_select %p197, %s21, 1
        %s199 = smul.addr %s198, 4
        %s200 = smul.addr %s199, 8
        %s201 = scalar_lea.vmem %s3, %s200
        %s202 = smul.u32 2, %s22
        %p203 = scmp.lt.s32.totalorder %s21, 1
        %s204 = scalar_select %p203, %s21, 1
        %s205 = smul.addr %s204, 4
        %s206 = smul.addr %s205, 8
        %s207 = scalar_lea.vmem %s3, %s206
        %p208 = scmp.eq.s32.totalorder %s22, 0
        // Predicated region
        $region37: #{tpu_custom_call.1} parent=31 // pred_check
          %p209 = pneg %p208
        $region38: #{tpu_custom_call.1} parent=31 // pred_check_branch
          %211 = sbr.rel (%p209) target = $region40
        $region39: #{tpu_custom_call.1} parent=31 // pred_region
          %212 = vst [vmem:[#allocation2] sm:$0xff] 0.0
          %213 = vst [vmem:[#allocation2 + $0x8] sm:$0xff] 0.0
          %214 = vst [vmem:[#allocation2 + $0x10] sm:$0xff] 0.0
          %215 = vst [vmem:[#allocation2 + $0x18] sm:$0xff] 0.0
          %216 = vst [vmem:[#allocation2 + $0x20] sm:$0xff] 0.0
          %217 = vst [vmem:[#allocation2 + $0x28] sm:$0xff] 0.0
          %218 = vst [vmem:[#allocation2 + $0x30] sm:$0xff] 0.0
          %219 = vst [vmem:[#allocation2 + $0x38] sm:$0xff] 0.0
          %220 = vst [vmem:[#allocation3] sm:$0xff] -inf
          %221 = vst [vmem:[#allocation3 + $0x8] sm:$0xff] -inf
          %222 = vst [vmem:[#allocation3 + $0x10] sm:$0xff] -inf
          %223 = vst [vmem:[#allocation3 + $0x18] sm:$0xff] -inf
          %224 = vst [vmem:[#allocation3 + $0x20] sm:$0xff] -inf
          %225 = vst [vmem:[#allocation3 + $0x28] sm:$0xff] -inf
          %226 = vst [vmem:[#allocation3 + $0x30] sm:$0xff] -inf
          %227 = vst [vmem:[#allocation3 + $0x38] sm:$0xff] -inf
        $region40: #{tpu_custom_call.1} parent=31 // pred_fallthru
          _
        %v228 = vld [vmem:[%s179] sm:$0xff]
        %v229 = vld [vmem:[%s179 + $0x8] sm:$0xff]
        %v230 = vld [vmem:[%s179 + $0x10] sm:$0xff]
        %v231 = vld [vmem:[%s179 + $0x18] sm:$0xff]
        %v232 = vld [vmem:[%s179 + $0x20] sm:$0xff]
        %v233 = vld [vmem:[%s179 + $0x28] sm:$0xff]
        %v234 = vld [vmem:[%s179 + $0x30] sm:$0xff]
        %v235 = vld [vmem:[%s179 + $0x38] sm:$0xff]
        %v236 = vld [vmem:[#allocation2] sm:$0xff]
        %v237 = vld [vmem:[#allocation2 + $0x8] sm:$0xff]
        %v238 = vld [vmem:[#allocation2 + $0x10] sm:$0xff]
        %v239 = vld [vmem:[#allocation2 + $0x18] sm:$0xff]
        %v240 = vld [vmem:[#allocation2 + $0x20] sm:$0xff]
        %v241 = vld [vmem:[#allocation2 + $0x28] sm:$0xff]
        %v242 = vld [vmem:[#allocation2 + $0x30] sm:$0xff]
        %v243 = vld [vmem:[#allocation2 + $0x38] sm:$0xff]
        %v244 = vadd.f32 %v236, %v228
        %v245 = vadd.f32 %v237, %v229
        %v246 = vadd.f32 %v238, %v230
        %v247 = vadd.f32 %v239, %v231
        %v248 = vadd.f32 %v240, %v232
        %v249 = vadd.f32 %v241, %v233
        %v250 = vadd.f32 %v242, %v234
        %v251 = vadd.f32 %v243, %v235
        %252 = vst [vmem:[#allocation2] sm:$0xff] %v244
        %253 = vst [vmem:[#allocation2 + $0x8] sm:$0xff] %v245
        %254 = vst [vmem:[#allocation2 + $0x10] sm:$0xff] %v246
        %255 = vst [vmem:[#allocation2 + $0x18] sm:$0xff] %v247
        %256 = vst [vmem:[#allocation2 + $0x20] sm:$0xff] %v248
        %257 = vst [vmem:[#allocation2 + $0x28] sm:$0xff] %v249
        %258 = vst [vmem:[#allocation2 + $0x30] sm:$0xff] %v250
        %259 = vst [vmem:[#allocation2 + $0x38] sm:$0xff] %v251
        %v260 = vld [vmem:[#allocation3] sm:$0xff]
        %v261 = vld [vmem:[#allocation3 + $0x8] sm:$0xff]
        %v262 = vld [vmem:[#allocation3 + $0x10] sm:$0xff]
        %v263 = vld [vmem:[#allocation3 + $0x18] sm:$0xff]
        %v264 = vld [vmem:[#allocation3 + $0x20] sm:$0xff]
        %v265 = vld [vmem:[#allocation3 + $0x28] sm:$0xff]
        %v266 = vld [vmem:[#allocation3 + $0x30] sm:$0xff]
        %v267 = vld [vmem:[#allocation3 + $0x38] sm:$0xff]
        %v268 = vmax.f32 %v260, %v228
        %v269 = vmax.f32 %v261, %v229
        %v270 = vmax.f32 %v262, %v230
        %v271 = vmax.f32 %v263, %v231
        %v272 = vmax.f32 %v264, %v232
        %v273 = vmax.f32 %v265, %v233
        %v274 = vmax.f32 %v266, %v234
        %v275 = vmax.f32 %v267, %v235
        %276 = vst [vmem:[#allocation3] sm:$0xff] %v268
        %277 = vst [vmem:[#allocation3 + $0x8] sm:$0xff] %v269
        %278 = vst [vmem:[#allocation3 + $0x10] sm:$0xff] %v270
        %279 = vst [vmem:[#allocation3 + $0x18] sm:$0xff] %v271
        %280 = vst [vmem:[#allocation3 + $0x20] sm:$0xff] %v272
        %281 = vst [vmem:[#allocation3 + $0x28] sm:$0xff] %v273
        %282 = vst [vmem:[#allocation3 + $0x30] sm:$0xff] %v274
        %283 = vst [vmem:[#allocation3 + $0x38] sm:$0xff] %v275
        // Predicated region
        $region41: #{tpu_custom_call.1} parent=31 // pred_check
          %p284 = pneg %p208
        $region42: #{tpu_custom_call.1} parent=31 // pred_check_branch
          %286 = sbr.rel (%p284) target = $region44
        $region43: #{tpu_custom_call.1} parent=31 // pred_region
          %v287 = vld [vmem:[#allocation2] sm:$0xff]
          %v288 = vld [vmem:[#allocation2 + $0x8] sm:$0xff]
          %v289 = vld [vmem:[#allocation2 + $0x10] sm:$0xff]
          %v290 = vld [vmem:[#allocation2 + $0x18] sm:$0xff]
          %v291 = vld [vmem:[#allocation2 + $0x20] sm:$0xff]
          %v292 = vld [vmem:[#allocation2 + $0x28] sm:$0xff]
          %v293 = vld [vmem:[#allocation2 + $0x30] sm:$0xff]
          %v294 = vld [vmem:[#allocation2 + $0x38] sm:$0xff]
          %v295 = vadd.f32 %v287, %v288
          %296 = vadd.xlane.f32.xlu0 %v295
          %v297 = vpop.xlane.xlu0 %296
          %v298 = vadd.f32 %v289, %v290
          %299 = vadd.xlane.f32.xlu0 %v298
          %v300 = vpop.xlane.xlu0 %299
          %v301 = vadd.f32 %v291, %v292
          %302 = vadd.xlane.f32.xlu0 %v301
          %v303 = vpop.xlane.xlu0 %302
          %v304 = vadd.f32 %v293, %v294
          %305 = vadd.xlane.f32.xlu0 %v304
          %v306 = vpop.xlane.xlu0 %305
          %v307 = vmul.f32 %v297, 0.00390625
          %v308 = vmul.f32 %v300, 0.00390625
          %v309 = vmul.f32 %v303, 0.00390625
          %v310 = vmul.f32 %v306, 0.00390625
          %v311 = vld [vmem:[#allocation3] sm:$0xff]
          %v312 = vld [vmem:[#allocation3 + $0x8] sm:$0xff]
          %v313 = vld [vmem:[#allocation3 + $0x10] sm:$0xff]
          %v314 = vld [vmem:[#allocation3 + $0x18] sm:$0xff]
          %v315 = vld [vmem:[#allocation3 + $0x20] sm:$0xff]
          %v316 = vld [vmem:[#allocation3 + $0x28] sm:$0xff]
          %v317 = vld [vmem:[#allocation3 + $0x30] sm:$0xff]
          %v318 = vld [vmem:[#allocation3 + $0x38] sm:$0xff]
          %v319 = vmax.f32 %v311, %v312
          %320 = vmax.xlane.f32.xlu0 %v319
          %v321 = vpop.xlane.xlu0 %320
          %v322 = vmax.f32 %v313, %v314
          %323 = vmax.xlane.f32.xlu0 %v322
          %v324 = vpop.xlane.xlu0 %323
          %v325 = vmax.f32 %v315, %v316
          %326 = vmax.xlane.f32.xlu0 %v325
          %v327 = vpop.xlane.xlu0 %326
          %v328 = vmax.f32 %v317, %v318
          %329 = vmax.xlane.f32.xlu0 %v328
          %v330 = vpop.xlane.xlu0 %329
          %v331 = vld [vmem:[%s1] sm:$0xff]
          %v332 = vld [vmem:[%s1 + $0x8] sm:$0xff]
          %v333 = vld [vmem:[%s1 + $0x10] sm:$0xff]
          %v334 = vld [vmem:[%s1 + $0x18] sm:$0xff]
          %v335 = vmul.f32 %v331, %v307
          %v336 = vmul.f32 %v332, %v308
          %v337 = vmul.f32 %v333, %v309
          %v338 = vmul.f32 %v334, %v310
          %vm339 = vcmask 15360
          %v340 = vsel %vm339, %v335, 0.0
          %v341 = vsel %vm339, %v336, 0.0
          %v342 = vadd.f32 %v340, %v341
          %v343 = vsel %vm339, %v337, 0.0
          %v344 = vadd.f32 %v342, %v343
          %v345 = vsel %vm339, %v338, 0.0
          %v346 = vadd.f32 %v344, %v345
          %v347 = vrot.slane %v346, 4
          %v348 = vadd.f32 %v346, %v347
          %v349 = vrot.slane %v348, 2
          %v350 = vadd.f32 %v348, %v349
          %v351 = vrot.slane %v350, 1
          %v352 = vadd.f32 %v350, %v351
          %v353 = vmax.f32 %v352, 0.0
          %v354 = vld [vmem:[%s2] sm:$0xff]
          %v355 = vld [vmem:[%s2 + $0x8] sm:$0xff]
          %v356 = vld [vmem:[%s2 + $0x10] sm:$0xff]
          %v357 = vld [vmem:[%s2 + $0x18] sm:$0xff]
          %v358 = vmul.f32 %v354, %v353
          %v359 = vmul.f32 %v355, %v353
          %v360 = vmul.f32 %v356, %v353
          %v361 = vmul.f32 %v357, %v353
          %v362 = vsel %vm339, %v358, 0.0
          %363 = vadd.xlane.f32.xlu0 %v362
          %v364 = vpop.xlane.xlu0 %363
          %v365 = vsel %vm339, %v359, 0.0
          %366 = vadd.xlane.f32.xlu0 %v365
          %v367 = vpop.xlane.xlu0 %366
          %v368 = vsel %vm339, %v360, 0.0
          %369 = vadd.xlane.f32.xlu0 %v368
          %v370 = vpop.xlane.xlu0 %369
          %v371 = vsel %vm339, %v361, 0.0
          %372 = vadd.xlane.f32.xlu0 %v371
          %v373 = vpop.xlane.xlu0 %372
          %v374 = vmul.f32 %v331, %v321
          %v375 = vmul.f32 %v332, %v324
          %v376 = vmul.f32 %v333, %v327
          %v377 = vmul.f32 %v334, %v330
          %v378 = vsel %vm339, %v374, 0.0
          %v379 = vsel %vm339, %v375, 0.0
          %v380 = vadd.f32 %v378, %v379
          %v381 = vsel %vm339, %v376, 0.0
          %v382 = vadd.f32 %v380, %v381
          %v383 = vsel %vm339, %v377, 0.0
          %v384 = vadd.f32 %v382, %v383
          %v385 = vrot.slane %v384, 4
          %v386 = vadd.f32 %v384, %v385
          %v387 = vrot.slane %v386, 2
          %v388 = vadd.f32 %v386, %v387
          %v389 = vrot.slane %v388, 1
          %v390 = vadd.f32 %v388, %v389
          %v391 = vmax.f32 %v390, 0.0
          %v392 = vmul.f32 %v354, %v391
          %v393 = vmul.f32 %v355, %v391
          %v394 = vmul.f32 %v356, %v391
          %v395 = vmul.f32 %v357, %v391
          %v396 = vsel %vm339, %v392, 0.0
          %397 = vadd.xlane.f32.xlu0 %v396
          %v398 = vpop.xlane.xlu0 %397
          %v399 = vsel %vm339, %v393, 0.0
          %400 = vadd.xlane.f32.xlu0 %v399
          %v401 = vpop.xlane.xlu0 %400
          %v402 = vsel %vm339, %v394, 0.0
          %403 = vadd.xlane.f32.xlu0 %v402
          %v404 = vpop.xlane.xlu0 %403
          %v405 = vsel %vm339, %v395, 0.0
          %406 = vadd.xlane.f32.xlu0 %v405
          %v407 = vpop.xlane.xlu0 %406
          %v408 = vadd.f32 %v364, %v398
          %v409 = vadd.f32 %v367, %v401
          %v410 = vadd.f32 %v370, %v404
          %v411 = vadd.f32 %v373, %v407
          %v412 = vsub.f32 0.0, %v408
          %v413 = vsub.f32 0.0, %v409
          %v414 = vsub.f32 0.0, %v410
          %v415 = vsub.f32 0.0, %v411
          %v416 = vmul.f32 %v412, 1.442695
          %v417 = vpow.pop %v416
          %v418 = vmul.f32 %v413, 1.442695
          %v419 = vpow.pop %v418
          %v420 = vmul.f32 %v414, 1.442695
          %v421 = vpow.pop %v420
          %v422 = vmul.f32 %v415, 1.442695
          %v423 = vpow.pop %v422
          %v424 = vadd.f32 %v417, 1.0
          %v425 = vadd.f32 %v419, 1.0
          %v426 = vadd.f32 %v421, 1.0
          %v427 = vadd.f32 %v423, 1.0
          %v428 = vrcp.pop %v424
          %v429 = vmul.f32 1.0, %v428
          %v430 = vrcp.pop %v425
          %v431 = vmul.f32 1.0, %v430
          %v432 = vrcp.pop %v426
          %v433 = vmul.f32 1.0, %v432
          %v434 = vrcp.pop %v427
          %v435 = vmul.f32 1.0, %v434
          %vm436 = vcmask 7168
          %437 = vst.msk [vmem:[%s207] sm:$0xff] %vm436, %v429
          %438 = vst.msk [vmem:[%s207 + $0x8] sm:$0xff] %vm436, %v431
          %439 = vst.msk [vmem:[%s207 + $0x10] sm:$0xff] %vm436, %v433
          %440 = vst.msk [vmem:[%s207 + $0x18] sm:$0xff] %vm436, %v435
        $region44: #{tpu_custom_call.1} parent=31 // pred_fallthru
          _
        %p441 = scmp.lt.s32.totalorder %s21, 1
        %s442 = scalar_select %p441, %s21, 1
        %s443 = smul.addr %s442, 4
        %s444 = smul.addr %s443, 8
        %s445 = scalar_lea.vmem %s3, %s444
        // Predicated region
        $region45: #{tpu_custom_call.1} parent=31 // pred_check
          %p446 = pneg %p117
        $region46: #{tpu_custom_call.1} parent=31 // pred_check_branch
          %448 = sbr.rel (%p446) target = $region48
        $region47: #{tpu_custom_call.1} parent=31 // pred_region
          _
        $region48: #{tpu_custom_call.1} parent=31 // pred_fallthru
          _
      $region32: #{tpu_custom_call.1} parent=5 // pred_fallthru
        _
      %p449 = scmp.le.s32.totalorder 2, %s12
      // Predicated region
      $region49: #{tpu_custom_call.1} parent=5 // pred_check
        %p450 = pneg %p449
      $region50: #{tpu_custom_call.1} parent=5 // pred_check_branch
        %452 = sbr.rel (%p450) target = $region52
      $region51: #{tpu_custom_call.1} parent=5 // pred_region
        %s453 = ssub.s32 %s12, 2
        // Predicated region
        $region53: #{tpu_custom_call.1} parent=51 // pred_check
          %p454 = pneg %p123
        $region54: #{tpu_custom_call.1} parent=51 // pred_check_branch
          %456 = sbr.rel (%p454) target = $region56
        $region55: #{tpu_custom_call.1} parent=51 // pred_region
          %p457 = scmp.lt.s32.totalorder %s23, 1
          %s458 = scalar_select %p457, %s23, 1
          %s459 = smul.addr %s458, 4
          %s460 = smul.addr %s459, 8
          %s461 = scalar_lea.vmem %s3, %s460
        $region56: #{tpu_custom_call.1} parent=51 // pred_fallthru
          _
      $region52: #{tpu_custom_call.1} parent=5 // pred_fallthru
        _
    $region6: #{tpu_custom_call.1} parent=1 // loop_footer
      %s16 = sadd.s32 1, %s12
    $region7: #{tpu_custom_call.1} parent=1 // loop_footer_branch
      %11 = sbr.rel target = $region3
    $region8: #{tpu_custom_call.1} parent=1 // loop_exit
      _
    %462 = vsyncpa [#allocation5], 1
    %s463 = scalar_lea.sflag [#allocation5], 1
    %464 = vsyncpa %s463, 1

</llo_original>
